<compile_context>
chip_gen: v6e
topology: v6e:2x2x1
jax: 0.10.0
libtpu: 0.0.40
codegen_flags: <defaults>
</compile_context>

<pallas_src>
import functools
import math

import jax
import jax.numpy as jnp
from jax import lax
from jax.experimental import pallas as pl
from jax.experimental.pallas import tpu as pltpu

_LANE = 128
_SUBLANE = 8
_MiB = 1024 * 1024


def _cdiv(a, b):
    return -(-a // b)


def _round_down(x, m):
    return (x // m) * m


def _round_up(x, m):
    return ((x + m - 1) // m) * m


def _vmem_capacity_bytes():
    try:
        return int(pltpu.get_tpu_info().vmem_capacity_bytes)
    except Exception:
        return 64 * _MiB  # conservative: v7x per-TensorCore VMEM


def _padded_bytes(block, itemsize):
    """Conservative VMEM footprint of a block after (8,128) layout padding."""
    dims = list(block)
    dims[-1] = _round_up(dims[-1], _LANE)
    if len(dims) >= 2:
        dims[-2] = _round_up(dims[-2], _SUBLANE)
    return math.prod(dims) * itemsize


def _mean_kernel(x_ref, o_ref, acc_ref, *, red_grid_axis, block_red, red, inv_red):
    """Streaming mean; axis 1 of the block is the reduce axis in both layouts."""
    k = pl.program_id(red_grid_axis)

    @pl.when(k == 0)
    def _init():
        acc_ref[...] = jnp.zeros_like(acc_ref)

    x = x_ref[...].astype(jnp.float32)
    if red % block_red != 0:
        # cdiv grid: zero the padded (garbage) tail of the last reduce block.
        ridx = k * block_red + lax.broadcasted_iota(jnp.int32, x.shape, 1)
        x = jnp.where(ridx < red, x, 0.0)

    # Per-step partial sum into the f32 accumulator.  The collapse over the
    # reduce axis lowers to VALU vreg adds plus one XLU reduce per step; the
    # XLU slot is free and this is fully hidden under the HBM DMA.
    acc_ref[...] += jnp.sum(x, axis=1, keepdims=True)

    @pl.when(k == pl.num_programs(red_grid_axis) - 1)
    def _finalize():
        o_ref[...] = (acc_ref[...] * inv_red).astype(o_ref.dtype)


def _mean_single(x, dim):
    ndim = x.ndim
    if dim < 0:
        dim += ndim
    shape = x.shape
    outer = int(math.prod(shape[:dim]))
    red = int(shape[dim])
    inner = int(math.prod(shape[dim + 1:]))
    out_shape = shape[:dim] + (1,) + shape[dim + 1:]

    itemsize = jnp.dtype(x.dtype).itemsize
    inv_red = 1.0 / red

    vmem_cap = _vmem_capacity_bytes()
    # Big tiles amortise the ~0.35 us per-grid-step overhead even at v7x HBM
    # bandwidth; triple-buffered inputs must still sit well inside VMEM.
    budget = max(2 * _MiB, min(8 * _MiB, vmem_cap // 12))

    if inner > 1:
        # ---- Layout A: (outer, red, inner); reduce over the sublane axis. ----
        x_in = x.reshape(outer, red, inner)

        # Lane tile of `inner` (parallel): multiple of 128, or the full extent.
        if _SUBLANE * inner * itemsize <= budget:
            ti = inner
        else:
            ti = max(_LANE, _round_down(budget // (_SUBLANE * itemsize), _LANE))

        # Sublane tile of `red` (reduce): multiple of 8, or the full extent.
        max_tr = budget // (ti * itemsize)
        tr = red if red <= max_tr else max(_SUBLANE, _round_down(max_tr, _SUBLANE))

        # Rows of `outer` per step (leading dim: no layout quantum).
        to = max(1, min(outer, budget // (tr * ti * itemsize)))

        # v7x megacore: keep >= 2 steps on the parallel axes when possible.
        if _cdiv(outer, to) * _cdiv(inner, ti) < 2:
            if outer >= 2:
                to = _cdiv(outer, 2)
            elif inner >= 2 * _LANE:
                ti = _round_up(_cdiv(inner, 2), _LANE)

        grid = (_cdiv(outer, to), _cdiv(inner, ti), _cdiv(red, tr))
        in_block, in_map = (to, tr, ti), (lambda i, j, k: (i, k, j))
        out_block, out_map = (to, 1, ti), (lambda i, j, k: (i, 0, j))
        acc_block = (to, 1, ti)
        red_grid_axis = 2
        semantics = ("parallel", "parallel", "arbitrary")
        raw_out = jax.ShapeDtypeStruct((outer, 1, inner), x.dtype)
        block_red = tr
    else:
        # ---- Layout B: reduce over the (lane) last axis of (outer, red). ----
        # No wrapper transpose: the tensor is streamed in its native layout.
        x_in = x.reshape(outer, red)

        # Lane tile of `red` (reduce): multiple of 128, or the full extent.
        max_lanes = budget // (_SUBLANE * itemsize)
        tr = red if red <= max_lanes else max(_LANE, _round_down(max_lanes, _LANE))

        # Sublane tile of `outer` (parallel): multiple of 8, or the full extent.
        max_to = budget // (tr * itemsize)
        to = outer if outer <= max_to else max(_SUBLANE, _round_down(max_to, _SUBLANE))

        # v7x megacore: keep >= 2 steps on the parallel axis when possible
        # (needs outer > 8 so both blocks stay multiples of 8 sublanes).
        if _cdiv(outer, to) < 2 and outer > _SUBLANE:
            to = _round_up(_cdiv(outer, 2), _SUBLANE)

        grid = (_cdiv(outer, to), _cdiv(red, tr))
        in_block, in_map = (to, tr), (lambda i, k: (i, k))
        out_block, out_map = (to, 1), (lambda i, k: (i, 0))
        acc_block = (to, 1)
        red_grid_axis = 1
        semantics = ("parallel", "arbitrary")
        raw_out = jax.ShapeDtypeStruct((outer, 1), x.dtype)
        block_red = tr

    n_steps = math.prod(grid)
    n_in_bufs = 3 if n_steps >= 3 else 2
    footprint = (n_in_bufs * _padded_bytes(in_block, itemsize)
                 + 2 * _padded_bytes(out_block, itemsize)
                 + _padded_bytes(acc_block, 4))
    # Footprint-derived limit: overrides v5e's 16 MiB scoped default while
    # leaving headroom against v7x's 64 MiB physical per-core VMEM.
    vmem_limit = int(min(vmem_cap * 3 // 4, max(32 * _MiB, footprint + 16 * _MiB)))

    kernel = functools.partial(
        _mean_kernel,
        red_grid_axis=red_grid_axis,
        block_red=block_red,
        red=red,
        inv_red=inv_red,
    )
    compiler_params = pltpu.CompilerParams(
        dimension_semantics=semantics,
        vmem_limit_bytes=vmem_limit,
    )

    def _run(pipeline_mode):
        if pipeline_mode is None:
            in_spec = pl.BlockSpec(in_block, in_map)
        else:
            in_spec = pl.BlockSpec(in_block, in_map, pipeline_mode=pipeline_mode)
        return pl.pallas_call(
            kernel,
            out_shape=raw_out,
            grid_spec=pltpu.PrefetchScalarGridSpec(
                num_scalar_prefetch=0,
                grid=grid,
                in_specs=[in_spec],
                out_specs=pl.BlockSpec(out_block, out_map),
                scratch_shapes=[pltpu.VMEM(acc_block, jnp.float32)],
            ),
            compiler_params=compiler_params,
        )(x_in)

    try:
        out = _run(pl.Buffered(3) if n_in_bufs == 3 else None)
    except Exception:
        out = _run(None)  # fall back to the default double buffer

    return out.reshape(out_shape)


def mean_pallas(x, dim):
    """Equivalent of torch.Tensor.mean(dim=dim, keepdim=True) (float dtypes)."""
    if not jnp.issubdtype(x.dtype, jnp.floating):
        # torch.mean rejects integer tensors without an explicit dtype; mirror that.
        raise TypeError("mean_pallas requires a floating-point input")
    if isinstance(dim, (tuple, list)):
        # keepdim=True => sequential single-axis means (uniform weights) equal
        # the joint multi-axis mean exactly.
        out = x
        for d in sorted(int(d) % x.ndim for d in dim):
            out = _mean_single(out, d)
        return out
    return _mean_single(x, int(dim))


if __name__ == "__main__":
    key = jax.random.PRNGKey(0)
    x = jax.random.normal(key, (2, 4, 16, 16), dtype=jnp.float32)  # NCHW

    # Mean(dim=1): mean over channels, keepdim=True -> (2, 1, 16, 16)
    out = mean_pallas(x, 1)
    jax.block_until_ready(out)
    ref = jnp.mean(x, axis=1, keepdims=True)
    assert out.shape == ref.shape, (out.shape, ref.shape)
    assert jnp.allclose(out, ref, atol=1e-5, rtol=1e-5), float(
        jnp.max(jnp.abs(out - ref))
    )

    # Last-axis reduction exercises the (new) no-transpose lane-reduce path.
    out2 = mean_pallas(x, -1)
    jax.block_until_ready(out2)
    ref2 = jnp.mean(x, axis=-1, keepdims=True)
    assert out2.shape == ref2.shape, (out2.shape, ref2.shape)
    assert jnp.allclose(out2, ref2, atol=1e-5, rtol=1e-5), float(
        jnp.max(jnp.abs(out2 - ref2))
    )

    print("KERNEL_OK")
</pallas_src>

<mosaic_0001>
module attributes {stable_mosaic.version = 11 : i64} {
  func.func @_mean_kernel(%arg0: i32, %arg1: i32, %arg2: i32, %arg3: memref<1x4x256xf32, #tpu.memory_space<vmem>>, %arg4: memref<1x1x256xf32, #tpu.memory_space<vmem>>, %arg5: memref<1x1x256xf32, #tpu.memory_space<vmem>>) attributes {dimension_semantics = [#tpu.dimension_semantics<parallel>, #tpu.dimension_semantics<parallel>, #tpu.dimension_semantics<arbitrary>], iteration_bounds = array<i64: 2, 1, 1>, scalar_prefetch = 0 : i64, scratch_operands = 1 : i64, tpu.core_type = #tpu.core_type<tc>, window_params = [{transform_indices = @transform_0, window_bounds = array<i64: 1, 4, 256>}, {transform_indices = @transform_1, window_bounds = array<i64: 1, 1, 256>}]} {
    %c0_i32 = arith.constant 0 : i32
    %0 = arith.cmpi eq, %arg2, %c0_i32 : i32
    %1 = arith.extui %0 : i1 to i32
    %c0_i32_0 = arith.constant 0 : i32
    %2 = arith.cmpi ne, %1, %c0_i32_0 : i32
    scf.if %2 {
      %cst_11 = arith.constant 0.000000e+00 : f32
      %12 = vector.broadcast %cst_11 : f32 to vector<1x1x256xf32>
      %c0_12 = arith.constant 0 : index
      %c0_13 = arith.constant 0 : index
      %c0_14 = arith.constant 0 : index
      %13 = vector.load %arg5[%c0_12, %c0_13, %c0_14] : memref<1x1x256xf32, #tpu.memory_space<vmem>>, vector<1x1x256xf32>
      tpu.vector_store %arg5[%c0_12, %c0_13, %c0_14], %12 {strides = array<i32>} : memref<1x1x256xf32, #tpu.memory_space<vmem>>, vector<1x1x256xf32>,
    } else {
    }
    %c0 = arith.constant 0 : index
    %c0_1 = arith.constant 0 : index
    %c0_2 = arith.constant 0 : index
    %3 = vector.load %arg3[%c0, %c0_1, %c0_2] : memref<1x4x256xf32, #tpu.memory_space<vmem>>, vector<1x4x256xf32>
    %c0_3 = arith.constant 0 : index
    %c0_4 = arith.constant 0 : index
    %c0_5 = arith.constant 0 : index
    %4 = vector.load %arg5[%c0_3, %c0_4, %c0_5] : memref<1x1x256xf32, #tpu.memory_space<vmem>>, vector<1x1x256xf32>
    %cst = arith.constant dense<0.000000e+00> : vector<1x256xf32>
    %5 = vector.multi_reduction <add>, %3, %cst [1] : vector<1x4x256xf32> to vector<1x256xf32>
    %6 = vector.shape_cast %5 : vector<1x256xf32> to vector<1x1x256xf32>
    %7 = arith.addf %4, %6 : vector<1x1x256xf32>
    %c0_6 = arith.constant 0 : index
    %c0_7 = arith.constant 0 : index
    %c0_8 = arith.constant 0 : index
    %8 = vector.load %arg5[%c0_6, %c0_7, %c0_8] : memref<1x1x256xf32, #tpu.memory_space<vmem>>, vector<1x1x256xf32>
    tpu.vector_store %arg5[%c0_6, %c0_7, %c0_8], %7 {strides = array<i32>} : memref<1x1x256xf32, #tpu.memory_space<vmem>>, vector<1x1x256xf32>,
    %c0_i32_9 = arith.constant 0 : i32
    %9 = arith.cmpi eq, %arg2, %c0_i32_9 : i32
    %10 = arith.extui %9 : i1 to i32
    %c0_i32_10 = arith.constant 0 : i32
    %11 = arith.cmpi ne, %10, %c0_i32_10 : i32
    scf.if %11 {
      %c0_11 = arith.constant 0 : index
      %c0_12 = arith.constant 0 : index
      %c0_13 = arith.constant 0 : index
      %12 = vector.load %arg5[%c0_11, %c0_12, %c0_13] : memref<1x1x256xf32, #tpu.memory_space<vmem>>, vector<1x1x256xf32>
      %cst_14 = arith.constant 2.500000e-01 : f32
      %13 = vector.broadcast %cst_14 : f32 to vector<1x1x256xf32>
      %14 = arith.mulf %12, %13 : vector<1x1x256xf32>
      %c0_15 = arith.constant 0 : index
      %c0_16 = arith.constant 0 : index
      %c0_17 = arith.constant 0 : index
      %15 = vector.load %arg4[%c0_15, %c0_16, %c0_17] : memref<1x1x256xf32, #tpu.memory_space<vmem>>, vector<1x1x256xf32>
      tpu.vector_store %arg4[%c0_15, %c0_16, %c0_17], %14 {strides = array<i32>} : memref<1x1x256xf32, #tpu.memory_space<vmem>>, vector<1x1x256xf32>,
    } else {
    }
    return
  }
  func.func @transform_0(%arg0: i32, %arg1: i32, %arg2: i32) -> (i32, i32, i32) {
    %c0_i32 = arith.constant 0 : i32
    return %arg0, %arg2, %arg1 : i32, i32, i32
  }
  func.func @transform_1(%arg0: i32, %arg1: i32, %arg2: i32) -> (i32, i32, i32) {
    %c0_i32 = arith.constant 0 : i32
    %c0_i32_0 = arith.constant 0 : i32
    return %arg0, %c0_i32, %arg1 : i32, i32, i32
  }
}

module attributes {stable_mosaic.version = 11 : i64} {
  func.func @_mean_kernel(%arg0: i32, %arg1: i32, %arg2: i32, %arg3: memref<1x4x256xf32, #tpu.memory_space<vmem>>, %arg4: memref<1x1x256xf32, #tpu.memory_space<vmem>>, %arg5: memref<1x1x256xf32, #tpu.memory_space<vmem>>) attributes {dimension_semantics = [#tpu.dimension_semantics<parallel>, #tpu.dimension_semantics<parallel>, #tpu.dimension_semantics<arbitrary>], iteration_bounds = array<i64: 2, 1, 1>, scalar_prefetch = 0 : i64, scratch_operands = 1 : i64, tpu.core_type = #tpu.core_type<tc>, window_params = [{transform_indices = @transform_0, window_bounds = array<i64: 1, 4, 256>}, {transform_indices = @transform_1, window_bounds = array<i64: 1, 1, 256>}]} {
    %c0_i32 = arith.constant 0 : i32
    %0 = arith.cmpi eq, %arg2, %c0_i32 : i32
    %1 = arith.extui %0 : i1 to i32
    %c0_i32_0 = arith.constant 0 : i32
    %2 = arith.cmpi ne, %1, %c0_i32_0 : i32
    scf.if %2 {
      %cst_11 = arith.constant 0.000000e+00 : f32
      %12 = vector.broadcast %cst_11 : f32 to vector<1x1x256xf32>
      %c0_12 = arith.constant 0 : index
      %c0_13 = arith.constant 0 : index
      %c0_14 = arith.constant 0 : index
      %13 = vector.load %arg5[%c0_12, %c0_13, %c0_14] : memref<1x1x256xf32, #tpu.memory_space<vmem>>, vector<1x1x256xf32>
      tpu.vector_store %arg5[%c0_12, %c0_13, %c0_14], %12 {strides = array<i32>} : memref<1x1x256xf32, #tpu.memory_space<vmem>>, vector<1x1x256xf32>,
    } else {
    }
    %c0 = arith.constant 0 : index
    %c0_1 = arith.constant 0 : index
    %c0_2 = arith.constant 0 : index
    %3 = vector.load %arg3[%c0, %c0_1, %c0_2] : memref<1x4x256xf32, #tpu.memory_space<vmem>>, vector<1x4x256xf32>
    %c0_3 = arith.constant 0 : index
    %c0_4 = arith.constant 0 : index
    %c0_5 = arith.constant 0 : index
    %4 = vector.load %arg5[%c0_3, %c0_4, %c0_5] : memref<1x1x256xf32, #tpu.memory_space<vmem>>, vector<1x1x256xf32>
    %cst = arith.constant dense<0.000000e+00> : vector<1x256xf32>
    %5 = vector.multi_reduction <add>, %3, %cst [1] : vector<1x4x256xf32> to vector<1x256xf32>
    %6 = vector.shape_cast %5 : vector<1x256xf32> to vector<1x1x256xf32>
    %7 = arith.addf %4, %6 : vector<1x1x256xf32>
    %c0_6 = arith.constant 0 : index
    %c0_7 = arith.constant 0 : index
    %c0_8 = arith.constant 0 : index
    %8 = vector.load %arg5[%c0_6, %c0_7, %c0_8] : memref<1x1x256xf32, #tpu.memory_space<vmem>>, vector<1x1x256xf32>
    tpu.vector_store %arg5[%c0_6, %c0_7, %c0_8], %7 {strides = array<i32>} : memref<1x1x256xf32, #tpu.memory_space<vmem>>, vector<1x1x256xf32>,
    %c0_i32_9 = arith.constant 0 : i32
    %9 = arith.cmpi eq, %arg2, %c0_i32_9 : i32
    %10 = arith.extui %9 : i1 to i32
    %c0_i32_10 = arith.constant 0 : i32
    %11 = arith.cmpi ne, %10, %c0_i32_10 : i32
    scf.if %11 {
      %c0_11 = arith.constant 0 : index
      %c0_12 = arith.constant 0 : index
      %c0_13 = arith.constant 0 : index
      %12 = vector.load %arg5[%c0_11, %c0_12, %c0_13] : memref<1x1x256xf32, #tpu.memory_space<vmem>>, vector<1x1x256xf32>
      %cst_14 = arith.constant 2.500000e-01 : f32
      %13 = vector.broadcast %cst_14 : f32 to vector<1x1x256xf32>
      %14 = arith.mulf %12, %13 : vector<1x1x256xf32>
      %c0_15 = arith.constant 0 : index
      %c0_16 = arith.constant 0 : index
      %c0_17 = arith.constant 0 : index
      %15 = vector.load %arg4[%c0_15, %c0_16, %c0_17] : memref<1x1x256xf32, #tpu.memory_space<vmem>>, vector<1x1x256xf32>
      tpu.vector_store %arg4[%c0_15, %c0_16, %c0_17], %14 {strides = array<i32>} : memref<1x1x256xf32, #tpu.memory_space<vmem>>, vector<1x1x256xf32>,
    } else {
    }
    return
  }
  func.func @transform_0(%arg0: i32, %arg1: i32, %arg2: i32) -> (i32, i32, i32) {
    %c0_i32 = arith.constant 0 : i32
    return %arg0, %arg2, %arg1 : i32, i32, i32
  }
  func.func @transform_1(%arg0: i32, %arg1: i32, %arg2: i32) -> (i32, i32, i32) {
    %c0_i32 = arith.constant 0 : i32
    %c0_i32_0 = arith.constant 0 : i32
    return %arg0, %c0_i32, %arg1 : i32, i32, i32
  }
}

</mosaic_0001>

<llo_original>
// kernel: tpu_custom_call.1
$region0: #{tpu_custom_call.1}
  #allocation0 [shape = 'u32[]', space=smem, size = 0x4, offset = 0x4, fixed_abs, tag = 'smem constant byte address 0x4 - core index']
  #allocation1 [shape = 'u32[144,128]{1,0:T(1,128)}', space=vmem, size = 0x12000, scoped, tag = 'internal scratch']
  #allocation2 [shape = 'f32[1,1,256]{2,1,0:T(1,128)}', space=vmem, size = 0x400, scoped, tag = 'scratch operand']
  %s0 = inlined_call_operand.hbm [shape: f32[2,4,256], index: 0, kind: input, shape index: {}]
  %s1 = inlined_call_operand.hbm [shape: f32[2,1,256], index: 1, kind: output, shape index: {}]
  %s2 = sld [smem:[#allocation0]]
  $region49: #{tpu_custom_call.1} parent=0
    _
  %s4 = ssub.s32 1, %s2
  %s5 = scalar_select 0, %s4, %s2
  $region1: #{tpu_custom_call.1} parent=0
    #allocation3 [shape = 'u8[8192]{0}', space=vmem, size = 0x2000, scoped, tag = 'input window, operand 0']
    #allocation4 [shape = 's32[2]{0}', space=sflag, size = 0x8, scoped, tag = 'scoped memory for tpu_custom_call.1']
    #allocation5 [shape = 's32[2]{0}', space=sflag, size = 0x8, scoped, tag = 'scoped memory for tpu_custom_call.1']
    #allocation6 [shape = 'u8[2048]{0}', space=vmem, size = 0x800, scoped, tag = 'output window, operand 0']
    %6 = vsyncpa [#allocation4], 0
    %s7 = scalar_lea.sflag [#allocation4], 1
    %8 = vsyncpa %s7, 0
    %9 = vsyncpa [#allocation5], 0
    %s10 = scalar_lea.sflag [#allocation5], 1
    %11 = vsyncpa %s10, 0
    loop: start=0, step=1, limit=4
    $region2: #{tpu_custom_call.1} parent=1 // loop_pre_header
      _
    $region3: #{tpu_custom_call.1} parent=1 // loop_header
      %s13 = sphi 0, %s17
      %p14 = scmp.ge.s32.totalorder %s13, 4
      %s20 = sphi 0, %s39
      %s21 = sphi 0, %s35
      %s22 = sphi 0, %s31
      %s23 = sphi 0, %s20
      %s24 = sphi 0, %s21
      %s25 = sphi 0, %s22
      %s26 = sphi 0, %s23
      %s27 = sphi 0, %s24
      %s28 = sphi 0, %s25
      %s46 = sphi 0, %s48
      %s49 = sphi 0, %s46
      %s50 = sphi 0, %s49
      %s66 = sphi 0, %s50
      %s74 = sphi 0, %s76
      %s77 = sphi 0, %s74
      %s78 = sphi 0, %s77
      %s94 = sphi 0, %s78
    $region4: #{tpu_custom_call.1} parent=1 // loop_header_branch
      %16 = sbr.rel (%p14) target = $region8
    $region5: #{tpu_custom_call.1} parent=1 // loop_body
      %s18 = ssub.s32 %s13, 1
      %s19 = ssub.s32 %s13, 2
      %s29 = sadd.s32 1, %s22
      %p30 = scmp.ge.s32.totalorder %s29, 1
      %s31 = scalar_select %p30, 0, %s29
      %s32 = sadd.s32 1, %s21
      %s33 = scalar_select %p30, %s32, %s21
      %p34 = scmp.ge.s32.totalorder %s33, 1
      %s35 = scalar_select %p34, 0, %s33
      %s36 = sadd.s32 1, %s20
      %s37 = scalar_select %p34, %s36, %s20
      %p38 = scmp.ge.s32.totalorder %s37, 2
      %s39 = scalar_select %p38, 0, %s37
      %s40 = ssub.s32 %s20, %s39
      %s41 = ssub.s32 %s22, %s31
      %s42 = sor.u32 %s40, %s41
      %s43 = ssub.s32 %s21, %s35
      %s44 = sor.u32 %s42, %s43
      %p45 = scmp.eq.s32.totalorder %s44, 0
      %s47 = sadd.s32 %s46, 1
      %s48 = scalar_select %p45, %s46, %s47
      %p51 = pneg %p45
      %p52 = scmp.eq.s32.totalorder %s13, 1
      %p53 = por %p51, %p52
      %p54 = scmp.ne.s32.totalorder %s46, %s49
      %p55 = scmp.eq.s32.totalorder %s13, 0
      %p56 = por %p54, %p55
      %p57 = scmp.ne.s32.totalorder %s46, %s49
      %p58 = scmp.eq.s32.totalorder %s18, 1
      %p59 = por %p57, %p58
      %p60 = scmp.ne.s32.totalorder %s49, %s50
      %p61 = scmp.eq.s32.totalorder %s18, 0
      %p62 = por %p60, %p61
      %p63 = scmp.ne.s32.totalorder %s49, %s50
      %p64 = scmp.eq.s32.totalorder %s19, 1
      %p65 = por %p63, %p64
      %p67 = scmp.ne.s32.totalorder %s50, %s66
      %p68 = scmp.eq.s32.totalorder %s19, 0
      %p69 = por %p67, %p68
      %s70 = ssub.s32 %s20, %s39
      %s71 = ssub.s32 %s21, %s35
      %s72 = sor.u32 %s70, %s71
      %p73 = scmp.eq.s32.totalorder %s72, 0
      %s75 = sadd.s32 %s74, 1
      %s76 = scalar_select %p73, %s74, %s75
      %p79 = pneg %p73
      %p80 = scmp.eq.s32.totalorder %s13, 1
      %p81 = por %p79, %p80
      %p82 = scmp.ne.s32.totalorder %s74, %s77
      %p83 = scmp.eq.s32.totalorder %s13, 0
      %p84 = por %p82, %p83
      %p85 = scmp.ne.s32.totalorder %s74, %s77
      %p86 = scmp.eq.s32.totalorder %s18, 1
      %p87 = por %p85, %p86
      %p88 = scmp.ne.s32.totalorder %s77, %s78
      %p89 = scmp.eq.s32.totalorder %s18, 0
      %p90 = por %p88, %p89
      %p91 = scmp.ne.s32.totalorder %s77, %s78
      %p92 = scmp.eq.s32.totalorder %s19, 1
      %p93 = por %p91, %p92
      %p95 = scmp.ne.s32.totalorder %s78, %s94
      %p96 = scmp.eq.s32.totalorder %s19, 0
      %p97 = por %p95, %p96
      %p98 = scmp.le.s32.totalorder 1, %s13
      %p99 = scmp.lt.s32.totalorder %s13, 3
      %p100 = pnand %p98, %p99
      %p101 = pneg %p100
      // Predicated region
      $region9: #{tpu_custom_call.1} parent=5 // pred_check
        _
      $region10: #{tpu_custom_call.1} parent=5 // pred_check_branch
        %103 = sbr.rel (%p100) target = $region12
      $region11: #{tpu_custom_call.1} parent=5 // pred_region
        %s104 = ssub.s32 %s13, 1
      $region12: #{tpu_custom_call.1} parent=5 // pred_fallthru
        _
      %p105 = scmp.lt.s32.totalorder %s13, 2
      // Predicated region
      $region13: #{tpu_custom_call.1} parent=5 // pred_check
        %p106 = pneg %p105
      $region14: #{tpu_custom_call.1} parent=5 // pred_check_branch
        %108 = sbr.rel (%p106) target = $region16
      $region15: #{tpu_custom_call.1} parent=5 // pred_region
        // Predicated region
        $region17: #{tpu_custom_call.1} parent=15 // pred_check
          %p109 = pneg %p56
        $region18: #{tpu_custom_call.1} parent=15 // pred_check_branch
          %111 = sbr.rel (%p109) target = $region20
        $region19: #{tpu_custom_call.1} parent=15 // pred_region
          %s112 = sand.u32 %s46, 1
          %s113 = scalar_lea.sflag [#allocation4], %s112
          %s114 = sand.u32 %s46, 1
          %s115 = smul.addr %s114, 8
          %s116 = scalar_lea.vmem [#allocation3], %s115
          %s117 = smul.u32 2, %s21
          %s119 = ssub.s32 128, 128
          %120 = vsyncadd %s113, %s119
          %s121 = smul.addr %s22, 2
          %s122 = sadd.s32 %s117, %s121
          %s123 = smul.addr %s20, 2
          %s124 = sadd.s32 %s122, %s123
          %s125 = smul.addr %s124, 64
          %s126 = scalar_lea.hbm %s0, %s125
          %s128 = sshll.u32 %s116, 4
          %s129 = int_to_ptr.vmem [resolvable:$true] %s128
          %131 = dma.hbm_to_vmem [thread:$0]  %s126, 128, %s129, %s113
        $region20: #{tpu_custom_call.1} parent=15 // pred_fallthru
          _
      $region16: #{tpu_custom_call.1} parent=5 // pred_fallthru
        _
      %p132 = scmp.le.s32.totalorder 1, %s13
      %p133 = scmp.lt.s32.totalorder %s13, 3
      %p134 = pnand %p132, %p133
      %p135 = pneg %p134
      // Predicated region
      $region21: #{tpu_custom_call.1} parent=5 // pred_check
        _
      $region22: #{tpu_custom_call.1} parent=5 // pred_check_branch
        %137 = sbr.rel (%p134) target = $region24
      $region23: #{tpu_custom_call.1} parent=5 // pred_region
        %s138 = ssub.s32 %s13, 1
        %s139 = sand.u32 %s49, 1
        %s140 = scalar_lea.sflag [#allocation4], %s139
        %s141 = sand.u32 %s49, 1
        %s142 = smul.addr %s141, 8
        %s143 = scalar_lea.vmem [#allocation3], %s142
        // Predicated region
        $region25: #{tpu_custom_call.1} parent=23 // pred_check
          %p144 = pneg %p62
        $region26: #{tpu_custom_call.1} parent=23 // pred_check_branch
          %146 = sbr.rel (%p144) target = $region28
        $region27: #{tpu_custom_call.1} parent=23 // pred_region
          %147 = dma.done %s140, 128
        $region28: #{tpu_custom_call.1} parent=23 // pred_fallthru
          _
        %s148 = sand.u32 %s49, 1
        %s149 = scalar_lea.sflag [#allocation4], %s148
        %s150 = sand.u32 %s49, 1
        %s151 = smul.addr %s150, 8
        %s152 = scalar_lea.vmem [#allocation3], %s151
        %p153 = pneg %p62
        %p154 = pneg %p59
        %p155 = pneg %p90
        %p156 = pneg %p87
        %s157 = sand.u32 %s77, 1
        %s158 = scalar_lea.sflag [#allocation5], %s157
        %s159 = sand.u32 %s77, 1
        %s160 = smul.addr %s159, 2
        %s161 = scalar_lea.vmem [#allocation6], %s160
        %s162 = smul.u32 2, %s24
        %s163 = smul.u32 2, %s24
        %p164 = scmp.eq.s32.totalorder %s25, 0
        // Predicated region
        $region29: #{tpu_custom_call.1} parent=23 // pred_check
          %p165 = pneg %p164
        $region30: #{tpu_custom_call.1} parent=23 // pred_check_branch
          %167 = sbr.rel (%p165) target = $region32
        $region31: #{tpu_custom_call.1} parent=23 // pred_region
          %v168 = vlaneseq
          %vm169 = vcmp.ge.s32.totalorder %v168, 0
          %vm170 = vcmp.lt.s32.totalorder %v168, 256
          %vm171 = vmand %vm169, %vm170
          %172 = vst.msk [vmem:[#allocation2] sm:$0x3] %vm171, 0.0
        $region32: #{tpu_custom_call.1} parent=23 // pred_fallthru
          _
        %v173 = vld [vmem:[%s143] sm:$0xff]
        %v174 = vld [vmem:[#allocation2] sm:$0x3]
        %v176 = vcombine.high %v173, %v173
        %vm178 = vcmask 1043456
        %v179 = vsel %vm178, %v173, 0.0
        %v180 = vrot.slane %v179, 4
        %v181 = vadd.f32 %v179, %v180
        %v182 = vrot.slane %v181, 2
        %v183 = vadd.f32 %v181, %v182
        %v184 = vrot.slane %v183, 1
        %v185 = vadd.f32 %v183, %v184
        %v186 = vsel %vm178, %v176, 0.0
        %v187 = vrot.slane %v186, 4
        %v188 = vadd.f32 %v186, %v187
        %v189 = vrot.slane %v188, 2
        %v190 = vadd.f32 %v188, %v189
        %v191 = vrot.slane %v190, 1
        %v192 = vadd.f32 %v190, %v191
        %v195 = vcombine.low %v185, %v192
        %v197 = vunpack.c.l.s4 1966171168
        %v198 = vunpack.c.0.s8 %v197
        %v199 = vlaneseq
        %v200 = vshrl.u32 %v199, 7
        %v201 = vsub.s32 %v198, %v200
        %v202 = vrot.slane %v195, %v201
        %v204 = vunpack.c.l.s4 1966171168
        %v205 = vunpack.c.0.s8 %v204
        %v206 = vlaneseq
        %v207 = vshrl.u32 %v206, 7
        %v208 = vsub.s32 %v205, %v207
        %v209 = vrot.slane %v202, %v208
        %v211 = vadd.f32 %v174, %v209
        %v212 = vlaneseq
        %vm213 = vcmp.ge.s32.totalorder %v212, 0
        %vm214 = vcmp.lt.s32.totalorder %v212, 256
        %vm215 = vmand %vm213, %vm214
        %216 = vst.msk [vmem:[#allocation2] sm:$0x3] %vm215, %v211
        // Predicated region
        $region33: #{tpu_custom_call.1} parent=23 // pred_check
          %p217 = pneg %p164
        $region34: #{tpu_custom_call.1} parent=23 // pred_check_branch
          %219 = sbr.rel (%p217) target = $region36
        $region35: #{tpu_custom_call.1} parent=23 // pred_region
          %v220 = vld [vmem:[#allocation2] sm:$0x3]
          %v221 = vmul.f32 %v220, 0.25
          %222 = vst.msk [vmem:[%s161] sm:$0x3] %vm215, %v221
        $region36: #{tpu_custom_call.1} parent=23 // pred_fallthru
          _
        %s223 = sand.u32 %s77, 1
        %s224 = scalar_lea.sflag [#allocation5], %s223
        %s225 = sand.u32 %s77, 1
        %s226 = smul.addr %s225, 2
        %s227 = scalar_lea.vmem [#allocation6], %s226
        // Predicated region
        $region37: #{tpu_custom_call.1} parent=23 // pred_check
          %p228 = pneg %p87
        $region38: #{tpu_custom_call.1} parent=23 // pred_check_branch
          %230 = sbr.rel (%p228) target = $region40
        $region39: #{tpu_custom_call.1} parent=23 // pred_region
          %s231 = smul.u32 2, %s24
          %s233 = ssub.s32 32, 32
          %234 = vsyncadd %s224, %s233
          %s235 = smul.addr %s23, 2
          %s236 = sadd.s32 %s231, %s235
          %s237 = smul.addr %s236, 16
          %s238 = scalar_lea.hbm %s1, %s237
          %s240 = sshll.u32 %s227, 4
          %s241 = int_to_ptr.vmem [resolvable:$true] %s240
          %243 = dma.vmem_to_hbm [thread:$0]  %s241, 32, %s238, %s224
        $region40: #{tpu_custom_call.1} parent=23 // pred_fallthru
          _
      $region24: #{tpu_custom_call.1} parent=5 // pred_fallthru
        _
      %p244 = scmp.le.s32.totalorder 2, %s13
      // Predicated region
      $region41: #{tpu_custom_call.1} parent=5 // pred_check
        %p245 = pneg %p244
      $region42: #{tpu_custom_call.1} parent=5 // pred_check_branch
        %247 = sbr.rel (%p245) target = $region44
      $region43: #{tpu_custom_call.1} parent=5 // pred_region
        %s248 = ssub.s32 %s13, 2
        // Predicated region
        $region45: #{tpu_custom_call.1} parent=43 // pred_check
          %p249 = pneg %p93
        $region46: #{tpu_custom_call.1} parent=43 // pred_check_branch
          %251 = sbr.rel (%p249) target = $region48
        $region47: #{tpu_custom_call.1} parent=43 // pred_region
          %s252 = sand.u32 %s78, 1
          %s253 = scalar_lea.sflag [#allocation5], %s252
          %s254 = sand.u32 %s78, 1
          %s255 = smul.addr %s254, 2
          %s256 = scalar_lea.vmem [#allocation6], %s255
          %257 = dma.done %s253, 32
        $region48: #{tpu_custom_call.1} parent=43 // pred_fallthru
          _
      $region44: #{tpu_custom_call.1} parent=5 // pred_fallthru
        _
    $region6: #{tpu_custom_call.1} parent=1 // loop_footer
      %s17 = sadd.s32 1, %s13
    $region7: #{tpu_custom_call.1} parent=1 // loop_footer_branch
      %12 = sbr.rel target = $region3
    $region8: #{tpu_custom_call.1} parent=1 // loop_exit
      _
    %258 = vsyncpa [#allocation4], 1
    %s259 = scalar_lea.sflag [#allocation4], 1
    %260 = vsyncpa %s259, 1
    %261 = vsyncpa [#allocation5], 1
    %s262 = scalar_lea.sflag [#allocation5], 1
    %263 = vsyncpa %s262, 1

// kernel: tpu_custom_call.1
$region0: #{tpu_custom_call.1}
  #allocation0 [shape = 'u32[]', space=smem, size = 0x4, offset = 0x4, fixed_abs, tag = 'smem constant byte address 0x4 - core index']
  #allocation1 [shape = 'u32[144,128]{1,0:T(1,128)}', space=vmem, size = 0x12000, scoped, tag = 'internal scratch']
  #allocation2 [shape = 'f32[1,1,256]{2,1,0:T(1,128)}', space=vmem, size = 0x400, scoped, tag = 'scratch operand']
  %s0 = inlined_call_operand.hbm [shape: f32[2,4,256], index: 0, kind: input, shape index: {}]
  %s1 = inlined_call_operand.hbm [shape: f32[2,1,256], index: 1, kind: output, shape index: {}]
  %s2 = sld [smem:[#allocation0]]
  $region49: #{tpu_custom_call.1} parent=0
    _
  %s4 = ssub.s32 1, %s2
  %s5 = scalar_select 0, %s4, %s2
  $region1: #{tpu_custom_call.1} parent=0
    #allocation3 [shape = 'u8[8192]{0}', space=vmem, size = 0x2000, scoped, tag = 'input window, operand 0']
    #allocation4 [shape = 's32[2]{0}', space=sflag, size = 0x8, scoped, tag = 'scoped memory for tpu_custom_call.1']
    #allocation5 [shape = 's32[2]{0}', space=sflag, size = 0x8, scoped, tag = 'scoped memory for tpu_custom_call.1']
    #allocation6 [shape = 'u8[2048]{0}', space=vmem, size = 0x800, scoped, tag = 'output window, operand 0']
    %6 = vsyncpa [#allocation4], 0
    %s7 = scalar_lea.sflag [#allocation4], 1
    %8 = vsyncpa %s7, 0
    %9 = vsyncpa [#allocation5], 0
    %s10 = scalar_lea.sflag [#allocation5], 1
    %11 = vsyncpa %s10, 0
    loop: start=0, step=1, limit=4
    $region2: #{tpu_custom_call.1} parent=1 // loop_pre_header
      _
    $region3: #{tpu_custom_call.1} parent=1 // loop_header
      %s13 = sphi 0, %s17
      %p14 = scmp.ge.s32.totalorder %s13, 4
      %s20 = sphi 0, %s39
      %s21 = sphi 0, %s35
      %s22 = sphi 0, %s31
      %s23 = sphi 0, %s20
      %s24 = sphi 0, %s21
      %s25 = sphi 0, %s22
      %s26 = sphi 0, %s23
      %s27 = sphi 0, %s24
      %s28 = sphi 0, %s25
      %s46 = sphi 0, %s48
      %s49 = sphi 0, %s46
      %s50 = sphi 0, %s49
      %s66 = sphi 0, %s50
      %s74 = sphi 0, %s76
      %s77 = sphi 0, %s74
      %s78 = sphi 0, %s77
      %s94 = sphi 0, %s78
    $region4: #{tpu_custom_call.1} parent=1 // loop_header_branch
      %16 = sbr.rel (%p14) target = $region8
    $region5: #{tpu_custom_call.1} parent=1 // loop_body
      %s18 = ssub.s32 %s13, 1
      %s19 = ssub.s32 %s13, 2
      %s29 = sadd.s32 1, %s22
      %p30 = scmp.ge.s32.totalorder %s29, 1
      %s31 = scalar_select %p30, 0, %s29
      %s32 = sadd.s32 1, %s21
      %s33 = scalar_select %p30, %s32, %s21
      %p34 = scmp.ge.s32.totalorder %s33, 1
      %s35 = scalar_select %p34, 0, %s33
      %s36 = sadd.s32 1, %s20
      %s37 = scalar_select %p34, %s36, %s20
      %p38 = scmp.ge.s32.totalorder %s37, 2
      %s39 = scalar_select %p38, 0, %s37
      %s40 = ssub.s32 %s20, %s39
      %s41 = ssub.s32 %s22, %s31
      %s42 = sor.u32 %s40, %s41
      %s43 = ssub.s32 %s21, %s35
      %s44 = sor.u32 %s42, %s43
      %p45 = scmp.eq.s32.totalorder %s44, 0
      %s47 = sadd.s32 %s46, 1
      %s48 = scalar_select %p45, %s46, %s47
      %p51 = pneg %p45
      %p52 = scmp.eq.s32.totalorder %s13, 1
      %p53 = por %p51, %p52
      %p54 = scmp.ne.s32.totalorder %s46, %s49
      %p55 = scmp.eq.s32.totalorder %s13, 0
      %p56 = por %p54, %p55
      %p57 = scmp.ne.s32.totalorder %s46, %s49
      %p58 = scmp.eq.s32.totalorder %s18, 1
      %p59 = por %p57, %p58
      %p60 = scmp.ne.s32.totalorder %s49, %s50
      %p61 = scmp.eq.s32.totalorder %s18, 0
      %p62 = por %p60, %p61
      %p63 = scmp.ne.s32.totalorder %s49, %s50
      %p64 = scmp.eq.s32.totalorder %s19, 1
      %p65 = por %p63, %p64
      %p67 = scmp.ne.s32.totalorder %s50, %s66
      %p68 = scmp.eq.s32.totalorder %s19, 0
      %p69 = por %p67, %p68
      %s70 = ssub.s32 %s20, %s39
      %s71 = ssub.s32 %s21, %s35
      %s72 = sor.u32 %s70, %s71
      %p73 = scmp.eq.s32.totalorder %s72, 0
      %s75 = sadd.s32 %s74, 1
      %s76 = scalar_select %p73, %s74, %s75
      %p79 = pneg %p73
      %p80 = scmp.eq.s32.totalorder %s13, 1
      %p81 = por %p79, %p80
      %p82 = scmp.ne.s32.totalorder %s74, %s77
      %p83 = scmp.eq.s32.totalorder %s13, 0
      %p84 = por %p82, %p83
      %p85 = scmp.ne.s32.totalorder %s74, %s77
      %p86 = scmp.eq.s32.totalorder %s18, 1
      %p87 = por %p85, %p86
      %p88 = scmp.ne.s32.totalorder %s77, %s78
      %p89 = scmp.eq.s32.totalorder %s18, 0
      %p90 = por %p88, %p89
      %p91 = scmp.ne.s32.totalorder %s77, %s78
      %p92 = scmp.eq.s32.totalorder %s19, 1
      %p93 = por %p91, %p92
      %p95 = scmp.ne.s32.totalorder %s78, %s94
      %p96 = scmp.eq.s32.totalorder %s19, 0
      %p97 = por %p95, %p96
      %p98 = scmp.le.s32.totalorder 1, %s13
      %p99 = scmp.lt.s32.totalorder %s13, 3
      %p100 = pnand %p98, %p99
      %p101 = pneg %p100
      // Predicated region
      $region9: #{tpu_custom_call.1} parent=5 // pred_check
        _
      $region10: #{tpu_custom_call.1} parent=5 // pred_check_branch
        %103 = sbr.rel (%p100) target = $region12
      $region11: #{tpu_custom_call.1} parent=5 // pred_region
        %s104 = ssub.s32 %s13, 1
      $region12: #{tpu_custom_call.1} parent=5 // pred_fallthru
        _
      %p105 = scmp.lt.s32.totalorder %s13, 2
      // Predicated region
      $region13: #{tpu_custom_call.1} parent=5 // pred_check
        %p106 = pneg %p105
      $region14: #{tpu_custom_call.1} parent=5 // pred_check_branch
        %108 = sbr.rel (%p106) target = $region16
      $region15: #{tpu_custom_call.1} parent=5 // pred_region
        // Predicated region
        $region17: #{tpu_custom_call.1} parent=15 // pred_check
          %p109 = pneg %p56
        $region18: #{tpu_custom_call.1} parent=15 // pred_check_branch
          %111 = sbr.rel (%p109) target = $region20
        $region19: #{tpu_custom_call.1} parent=15 // pred_region
          %s112 = sand.u32 %s46, 1
          %s113 = scalar_lea.sflag [#allocation4], %s112
          %s114 = sand.u32 %s46, 1
          %s115 = smul.addr %s114, 8
          %s116 = scalar_lea.vmem [#allocation3], %s115
          %s117 = smul.u32 2, %s21
          %s119 = ssub.s32 128, 128
          %120 = vsyncadd %s113, %s119
          %s121 = smul.addr %s22, 2
          %s122 = sadd.s32 %s117, %s121
          %s123 = smul.addr %s20, 2
          %s124 = sadd.s32 %s122, %s123
          %s125 = smul.addr %s124, 64
          %s126 = scalar_lea.hbm %s0, %s125
          %s128 = sshll.u32 %s116, 4
          %s129 = int_to_ptr.vmem [resolvable:$true] %s128
          %131 = dma.hbm_to_vmem [thread:$0]  %s126, 128, %s129, %s113
        $region20: #{tpu_custom_call.1} parent=15 // pred_fallthru
          _
      $region16: #{tpu_custom_call.1} parent=5 // pred_fallthru
        _
      %p132 = scmp.le.s32.totalorder 1, %s13
      %p133 = scmp.lt.s32.totalorder %s13, 3
      %p134 = pnand %p132, %p133
      %p135 = pneg %p134
      // Predicated region
      $region21: #{tpu_custom_call.1} parent=5 // pred_check
        _
      $region22: #{tpu_custom_call.1} parent=5 // pred_check_branch
        %137 = sbr.rel (%p134) target = $region24
      $region23: #{tpu_custom_call.1} parent=5 // pred_region
        %s138 = ssub.s32 %s13, 1
        %s139 = sand.u32 %s49, 1
        %s140 = scalar_lea.sflag [#allocation4], %s139
        %s141 = sand.u32 %s49, 1
        %s142 = smul.addr %s141, 8
        %s143 = scalar_lea.vmem [#allocation3], %s142
        // Predicated region
        $region25: #{tpu_custom_call.1} parent=23 // pred_check
          %p144 = pneg %p62
        $region26: #{tpu_custom_call.1} parent=23 // pred_check_branch
          %146 = sbr.rel (%p144) target = $region28
        $region27: #{tpu_custom_call.1} parent=23 // pred_region
          %147 = dma.done %s140, 128
        $region28: #{tpu_custom_call.1} parent=23 // pred_fallthru
          _
        %s148 = sand.u32 %s49, 1
        %s149 = scalar_lea.sflag [#allocation4], %s148
        %s150 = sand.u32 %s49, 1
        %s151 = smul.addr %s150, 8
        %s152 = scalar_lea.vmem [#allocation3], %s151
        %p153 = pneg %p62
        %p154 = pneg %p59
        %p155 = pneg %p90
        %p156 = pneg %p87
        %s157 = sand.u32 %s77, 1
        %s158 = scalar_lea.sflag [#allocation5], %s157
        %s159 = sand.u32 %s77, 1
        %s160 = smul.addr %s159, 2
        %s161 = scalar_lea.vmem [#allocation6], %s160
        %s162 = smul.u32 2, %s24
        %s163 = smul.u32 2, %s24
        %p164 = scmp.eq.s32.totalorder %s25, 0
        // Predicated region
        $region29: #{tpu_custom_call.1} parent=23 // pred_check
          %p165 = pneg %p164
        $region30: #{tpu_custom_call.1} parent=23 // pred_check_branch
          %167 = sbr.rel (%p165) target = $region32
        $region31: #{tpu_custom_call.1} parent=23 // pred_region
          %v168 = vlaneseq
          %vm169 = vcmp.ge.s32.totalorder %v168, 0
          %vm170 = vcmp.lt.s32.totalorder %v168, 256
          %vm171 = vmand %vm169, %vm170
          %172 = vst.msk [vmem:[#allocation2] sm:$0x3] %vm171, 0.0
        $region32: #{tpu_custom_call.1} parent=23 // pred_fallthru
          _
        %v173 = vld [vmem:[%s143] sm:$0xff]
        %v174 = vld [vmem:[#allocation2] sm:$0x3]
        %v176 = vcombine.high %v173, %v173
        %vm178 = vcmask 1043456
        %v179 = vsel %vm178, %v173, 0.0
        %v180 = vrot.slane %v179, 4
        %v181 = vadd.f32 %v179, %v180
        %v182 = vrot.slane %v181, 2
        %v183 = vadd.f32 %v181, %v182
        %v184 = vrot.slane %v183, 1
        %v185 = vadd.f32 %v183, %v184
        %v186 = vsel %vm178, %v176, 0.0
        %v187 = vrot.slane %v186, 4
        %v188 = vadd.f32 %v186, %v187
        %v189 = vrot.slane %v188, 2
        %v190 = vadd.f32 %v188, %v189
        %v191 = vrot.slane %v190, 1
        %v192 = vadd.f32 %v190, %v191
        %v195 = vcombine.low %v185, %v192
        %v197 = vunpack.c.l.s4 1966171168
        %v198 = vunpack.c.0.s8 %v197
        %v199 = vlaneseq
        %v200 = vshrl.u32 %v199, 7
        %v201 = vsub.s32 %v198, %v200
        %v202 = vrot.slane %v195, %v201
        %v204 = vunpack.c.l.s4 1966171168
        %v205 = vunpack.c.0.s8 %v204
        %v206 = vlaneseq
        %v207 = vshrl.u32 %v206, 7
        %v208 = vsub.s32 %v205, %v207
        %v209 = vrot.slane %v202, %v208
        %v211 = vadd.f32 %v174, %v209
        %v212 = vlaneseq
        %vm213 = vcmp.ge.s32.totalorder %v212, 0
        %vm214 = vcmp.lt.s32.totalorder %v212, 256
        %vm215 = vmand %vm213, %vm214
        %216 = vst.msk [vmem:[#allocation2] sm:$0x3] %vm215, %v211
        // Predicated region
        $region33: #{tpu_custom_call.1} parent=23 // pred_check
          %p217 = pneg %p164
        $region34: #{tpu_custom_call.1} parent=23 // pred_check_branch
          %219 = sbr.rel (%p217) target = $region36
        $region35: #{tpu_custom_call.1} parent=23 // pred_region
          %v220 = vld [vmem:[#allocation2] sm:$0x3]
          %v221 = vmul.f32 %v220, 0.25
          %222 = vst.msk [vmem:[%s161] sm:$0x3] %vm215, %v221
        $region36: #{tpu_custom_call.1} parent=23 // pred_fallthru
          _
        %s223 = sand.u32 %s77, 1
        %s224 = scalar_lea.sflag [#allocation5], %s223
        %s225 = sand.u32 %s77, 1
        %s226 = smul.addr %s225, 2
        %s227 = scalar_lea.vmem [#allocation6], %s226
        // Predicated region
        $region37: #{tpu_custom_call.1} parent=23 // pred_check
          %p228 = pneg %p87
        $region38: #{tpu_custom_call.1} parent=23 // pred_check_branch
          %230 = sbr.rel (%p228) target = $region40
        $region39: #{tpu_custom_call.1} parent=23 // pred_region
          %s231 = smul.u32 2, %s24
          %s233 = ssub.s32 32, 32
          %234 = vsyncadd %s224, %s233
          %s235 = smul.addr %s23, 2
          %s236 = sadd.s32 %s231, %s235
          %s237 = smul.addr %s236, 16
          %s238 = scalar_lea.hbm %s1, %s237
          %s240 = sshll.u32 %s227, 4
          %s241 = int_to_ptr.vmem [resolvable:$true] %s240
          %243 = dma.vmem_to_hbm [thread:$0]  %s241, 32, %s238, %s224
        $region40: #{tpu_custom_call.1} parent=23 // pred_fallthru
          _
      $region24: #{tpu_custom_call.1} parent=5 // pred_fallthru
        _
      %p244 = scmp.le.s32.totalorder 2, %s13
      // Predicated region
      $region41: #{tpu_custom_call.1} parent=5 // pred_check
        %p245 = pneg %p244
      $region42: #{tpu_custom_call.1} parent=5 // pred_check_branch
        %247 = sbr.rel (%p245) target = $region44
      $region43: #{tpu_custom_call.1} parent=5 // pred_region
        %s248 = ssub.s32 %s13, 2
        // Predicated region
        $region45: #{tpu_custom_call.1} parent=43 // pred_check
          %p249 = pneg %p93
        $region46: #{tpu_custom_call.1} parent=43 // pred_check_branch
          %251 = sbr.rel (%p249) target = $region48
        $region47: #{tpu_custom_call.1} parent=43 // pred_region
          %s252 = sand.u32 %s78, 1
          %s253 = scalar_lea.sflag [#allocation5], %s252
          %s254 = sand.u32 %s78, 1
          %s255 = smul.addr %s254, 2
          %s256 = scalar_lea.vmem [#allocation6], %s255
          %257 = dma.done %s253, 32
        $region48: #{tpu_custom_call.1} parent=43 // pred_fallthru
          _
      $region44: #{tpu_custom_call.1} parent=5 // pred_fallthru
        _
    $region6: #{tpu_custom_call.1} parent=1 // loop_footer
      %s17 = sadd.s32 1, %s13
    $region7: #{tpu_custom_call.1} parent=1 // loop_footer_branch
      %12 = sbr.rel target = $region3
    $region8: #{tpu_custom_call.1} parent=1 // loop_exit
      _
    %258 = vsyncpa [#allocation4], 1
    %s259 = scalar_lea.sflag [#allocation4], 1
    %260 = vsyncpa %s259, 1
    %261 = vsyncpa [#allocation5], 1
    %s262 = scalar_lea.sflag [#allocation5], 1
    %263 = vsyncpa %s262, 1

</llo_original>
